<compile_context>
chip_gen: v5e
topology: v5e:2x2
jax: 0.10.0
libtpu: 0.0.40
codegen_flags: <defaults>
</compile_context>

<pallas_src>
import functools

import jax
import jax.numpy as jnp
from jax.experimental import pallas as pl
from jax.experimental.pallas import tpu as pltpu


def _round_up(n: int, m: int) -> int:
    return ((n + m - 1) // m) * m


def _tile_k(kp: int) -> int:
    """Lane (last-dim) tile: multiple of 128 that divides the padded K."""
    for cand in (512, 256, 128):
        if kp % cand == 0:
            return cand
    return kp


def _tile_b(b: int) -> int:
    """Second-to-last block dim must be a multiple of 8 or the full extent."""
    if b <= 8 or b % 8 != 0:
        return b
    return 8


def _tile_cout(cout: int, tb: int, tk: int, acc_budget_bytes: int = 128 * 1024) -> int:
    """Cout tile: multiple of 8 (or full), capped so the two f32 accumulators
    (tb*tco*tk each) stay roughly register-resident."""
    if cout % 8 != 0:
        return cout
    cap = max(8, acc_budget_bytes // (tb * tk * 2 * 4))
    for cand in (32, 16, 8):
        if cand <= cap and cout % cand == 0:
            return cand
    return 8


def _spectral_mul_kernel(x_ref, w_ref, o_ref):
    """Complex multiply-accumulate over input channels.

    x_ref : (Cin, 2, tB, tK)   packed [real, imag] truncated spectrum
    w_ref : (Cin, 2, tCo, tK)  packed [real, imag] spectral weights
    o_ref : (2, tB, tCo, tK)   packed [real, imag] result
    """
    cin = x_ref.shape[0]
    tb, tk = x_ref.shape[2], x_ref.shape[3]
    tco = w_ref.shape[2]

    def body(i, acc):
        acc_r, acc_i = acc
        xc = x_ref[i]                       # (2, tB, tK)  per-iteration load
        wc = w_ref[i]                       # (2, tCo, tK)
        xr = xc[0][:, None, :]              # (tB, 1, tK)
        xi = xc[1][:, None, :]
        wr = wc[0][None, :, :]              # (1, tCo, tK)
        wi = wc[1][None, :, :]
        acc_r = acc_r + (xr * wr - xi * wi)
        acc_i = acc_i + (xr * wi + xi * wr)
        return acc_r, acc_i

    zero = jnp.zeros((tb, tco, tk), jnp.float32)
    acc_r, acc_i = jax.lax.fori_loop(0, cin, body, (zero, zero),
                                     unroll=min(cin, 8))
    o_ref[0] = acc_r
    o_ref[1] = acc_i


def _spectral_mul_fused(x_c1, x_c2, w1, w2):
    """einsum('bixy,ioxy->boxy') for both mode corners in one Pallas call.

    x_c1, x_c2 : (B, Cin, M, M)     complex64 spectrum corners
    w1, w2     : (Cin, Cout, M, M)  complex64 spectral weights
    returns    : (B, Cout, 2, M, M) complex64 (corner1, corner2 on axis 2)
    """
    b, cin, m, _ = x_c1.shape
    cout = w1.shape[1]
    kc = 2 * m * m                       # both corners fused on the mode axis
    kp = _round_up(kc, 128)              # lane-dense last dim

    # (B, Cin, 2, M, M) -> (Cin, B, Kc): Cin leading for in-kernel ref slicing.
    x = jnp.stack([x_c1, x_c2], axis=2).reshape(b, cin, kc)
    x = jnp.transpose(x, (1, 0, 2))
    w = jnp.stack([w1, w2], axis=2).reshape(cin, cout, kc)

    # Pack real/imag as a size-2 axis: 2 input streams + 1 output stream.
    x_pack = jnp.stack([jnp.real(x), jnp.imag(x)], axis=1).astype(jnp.float32)
    w_pack = jnp.stack([jnp.real(w), jnp.imag(w)], axis=1).astype(jnp.float32)
    if kp != kc:
        pad = ((0, 0), (0, 0), (0, 0), (0, kp - kc))
        x_pack = jnp.pad(x_pack, pad)
        w_pack = jnp.pad(w_pack, pad)

    tk = _tile_k(kp)
    tb = _tile_b(b)
    tco = _tile_cout(cout, tb, tk)
    grid = (b // tb, cout // tco, kp // tk)

    out = pl.pallas_call(
        _spectral_mul_kernel,
        out_shape=jax.ShapeDtypeStruct((2, b, cout, kp), jnp.float32),
        grid_spec=pltpu.PrefetchScalarGridSpec(
            num_scalar_prefetch=0,
            grid=grid,
            in_specs=[
                pl.BlockSpec((cin, 2, tb, tk), lambda bi, co, k: (0, 0, bi, k)),
                pl.BlockSpec((cin, 2, tco, tk), lambda bi, co, k: (0, 0, co, k)),
            ],
            out_specs=pl.BlockSpec((2, tb, tco, tk),
                                   lambda bi, co, k: (0, bi, co, k)),
        ),
        compiler_params=pltpu.CompilerParams(
            # All grid axes are independent -> megacore-shardable on v7x;
            # harmless no-op on single-TC v5e/v6e.
            dimension_semantics=("parallel", "parallel", "parallel"),
            vmem_limit_bytes=32 * 1024 * 1024,
        ),
    )(x_pack, w_pack)

    out_c = (out[0, :, :, :kc] + 1j * out[1, :, :, :kc]).astype(jnp.complex64)
    return out_c.reshape(b, cout, 2, m, m)


def fourier_layer_2d(x, weights1, weights2, modes, fft_norm=None, use_pallas=None):
    """FourierLayer.forward for problem_dim == 2.

    x: (B, Cin, H, W) float32  ->  (B, Cout, H, W) float32
    """
    b, cin, h, w_sz = x.shape
    cout = weights1.shape[1]
    assert modes <= h and modes <= w_sz // 2 + 1, "modes exceed retained spectrum"

    if use_pallas is None:
        # Tiny problems are pure launch overhead vs XLA's fused einsum; the
        # FFTs dominate wall time there anyway.
        use_pallas = b * cin * cout * modes * modes >= (1 << 18)

    x_ft = jnp.fft.rfft2(x, norm=fft_norm)              # (B, Cin, H, W//2+1)
    xc1 = x_ft[:, :, :modes, :modes]
    xc2 = x_ft[:, :, h - modes:, :modes]

    if use_pallas:
        blk = _spectral_mul_fused(xc1, xc2, weights1, weights2)
        blk1, blk2 = blk[:, :, 0], blk[:, :, 1]
    else:
        blk1 = jnp.einsum('bixy,ioxy->boxy', xc1, weights1)
        blk2 = jnp.einsum('bixy,ioxy->boxy', xc2, weights2)

    out_ft = jnp.zeros((b, cout, h, w_sz // 2 + 1), jnp.complex64)
    out_ft = out_ft.at[:, :, :modes, :modes].set(blk1)
    out_ft = out_ft.at[:, :, h - modes:, :modes].set(blk2)
    return jnp.fft.irfft2(out_ft, s=(h, w_sz), norm=fft_norm)


def fourier_layer_2d_reference(x, weights1, weights2, modes, fft_norm=None):
    """Pure-JAX reference (mirrors the PyTorch forward)."""
    b, cin, h, w_sz = x.shape
    cout = weights1.shape[1]
    x_ft = jnp.fft.rfft2(x, norm=fft_norm)
    out_ft = jnp.zeros((b, cout, h, w_sz // 2 + 1), jnp.complex64)
    out_ft = out_ft.at[:, :, :modes, :modes].set(
        jnp.einsum('bixy,ioxy->boxy', x_ft[:, :, :modes, :modes], weights1))
    out_ft = out_ft.at[:, :, h - modes:, :modes].set(
        jnp.einsum('bixy,ioxy->boxy', x_ft[:, :, -modes:, :modes], weights2))
    return jnp.fft.irfft2(out_ft, s=(h, w_sz), norm=fft_norm)


if __name__ == "__main__":
    # Module config: problem_dim=2, in_channels=4, out_channels=4, modes=4,
    # FFTnorm=None ("backward", PyTorch default). fun_act / weights_norm are
    # unused in forward.
    B, Cin, Cout, H, W, modes = 2, 4, 4, 16, 16, 4

    key = jax.random.PRNGKey(0)
    kx, kw1r, kw1i, kw2r, kw2i = jax.random.split(key, 5)

    x = jax.random.normal(kx, (B, Cin, H, W), dtype=jnp.float32)

    # Deterministic init mimicking: scale * torch.rand(..., dtype=cfloat)
    scale = 1.0 / (Cin * Cout)
    weights1 = (scale * (
        jax.random.uniform(kw1r, (Cin, Cout, modes, modes), dtype=jnp.float32)
        + 1j * jax.random.uniform(kw1i, (Cin, Cout, modes, modes), dtype=jnp.float32)
    )).astype(jnp.complex64)
    weights2 = (scale * (
        jax.random.uniform(kw2r, (Cin, Cout, modes, modes), dtype=jnp.float32)
        + 1j * jax.random.uniform(kw2i, (Cin, Cout, modes, modes), dtype=jnp.float32)
    )).astype(jnp.complex64)

    # Force the Pallas path at the demo size so the kernel is exercised
    # (the default gate would route this tiny problem to XLA's einsum).
    fwd = jax.jit(functools.partial(fourier_layer_2d, modes=modes,
                                    fft_norm=None, use_pallas=True))
    out = fwd(x, weights1, weights2)
    out = jax.block_until_ready(out)

    ref = fourier_layer_2d_reference(x, weights1, weights2, modes, fft_norm=None)
    ref = jax.block_until_ready(ref)

    assert out.shape == (B, Cout, H, W)
    assert jnp.allclose(out, ref, atol=1e-5, rtol=1e-5), "mismatch vs reference"

    print("KERNEL_OK")
</pallas_src>

<mosaic_0001>
module attributes {stable_mosaic.version = 11 : i64} {
  func.func @_spectral_mul_kernel(%arg0: i32, %arg1: i32, %arg2: i32, %arg3: memref<4x2x2x128xf32, #tpu.memory_space<vmem>>, %arg4: memref<4x2x4x128xf32, #tpu.memory_space<vmem>>, %arg5: memref<2x2x4x128xf32, #tpu.memory_space<vmem>>) attributes {dimension_semantics = [#tpu.dimension_semantics<parallel>, #tpu.dimension_semantics<parallel>, #tpu.dimension_semantics<parallel>], iteration_bounds = array<i64: 1, 1, 1>, scalar_prefetch = 0 : i64, scratch_operands = 0 : i64, tpu.core_type = #tpu.core_type<tc>, window_params = [{transform_indices = @transform_0, window_bounds = array<i64: 4, 2, 2, 128>}, {transform_indices = @transform_1, window_bounds = array<i64: 4, 2, 4, 128>}, {transform_indices = @transform_2, window_bounds = array<i64: 2, 2, 4, 128>}]} {
    %cst = arith.constant 0.000000e+00 : f32
    %0 = vector.broadcast %cst : f32 to vector<2x4x128xf32>
    %c0_i32 = arith.constant 0 : i32
    %1 = arith.index_cast %c0_i32 : i32 to index
    %c0 = arith.constant 0 : index
    %c0_0 = arith.constant 0 : index
    %c0_1 = arith.constant 0 : index
    %2 = vector.load %arg3[%1, %c0, %c0_0, %c0_1] : memref<4x2x2x128xf32, #tpu.memory_space<vmem>>, vector<1x2x2x128xf32>
    %3 = vector.shape_cast %2 : vector<1x2x2x128xf32> to vector<2x2x128xf32>
    %4 = arith.index_cast %c0_i32 : i32 to index
    %c0_2 = arith.constant 0 : index
    %c0_3 = arith.constant 0 : index
    %c0_4 = arith.constant 0 : index
    %5 = vector.load %arg4[%4, %c0_2, %c0_3, %c0_4] : memref<4x2x4x128xf32, #tpu.memory_space<vmem>>, vector<1x2x4x128xf32>
    %6 = vector.shape_cast %5 : vector<1x2x4x128xf32> to vector<2x4x128xf32>
    %7 = vector.extract_strided_slice %3 {offsets = [0, 0, 0], sizes = [1, 2, 128], strides = [1, 1, 1]} : vector<2x2x128xf32> to vector<1x2x128xf32>
    %8 = vector.shape_cast %7 : vector<1x2x128xf32> to vector<2x128xf32>
    %9 = vector.shape_cast %8 : vector<2x128xf32> to vector<2x1x128xf32>
    %10 = vector.extract_strided_slice %3 {offsets = [1, 0, 0], sizes = [1, 2, 128], strides = [1, 1, 1]} : vector<2x2x128xf32> to vector<1x2x128xf32>
    %11 = vector.shape_cast %10 : vector<1x2x128xf32> to vector<2x128xf32>
    %12 = vector.shape_cast %11 : vector<2x128xf32> to vector<2x1x128xf32>
    %13 = vector.extract_strided_slice %6 {offsets = [0, 0, 0], sizes = [1, 4, 128], strides = [1, 1, 1]} : vector<2x4x128xf32> to vector<1x4x128xf32>
    %14 = vector.shape_cast %13 : vector<1x4x128xf32> to vector<4x128xf32>
    %15 = vector.shape_cast %14 : vector<4x128xf32> to vector<1x4x128xf32>
    %16 = vector.extract_strided_slice %6 {offsets = [1, 0, 0], sizes = [1, 4, 128], strides = [1, 1, 1]} : vector<2x4x128xf32> to vector<1x4x128xf32>
    %17 = vector.shape_cast %16 : vector<1x4x128xf32> to vector<4x128xf32>
    %18 = vector.shape_cast %17 : vector<4x128xf32> to vector<1x4x128xf32>
    %19 = vector.broadcast %9 : vector<2x1x128xf32> to vector<2x4x128xf32>
    %20 = vector.broadcast %15 : vector<1x4x128xf32> to vector<2x4x128xf32>
    %21 = arith.mulf %19, %20 : vector<2x4x128xf32>
    %22 = vector.broadcast %12 : vector<2x1x128xf32> to vector<2x4x128xf32>
    %23 = vector.broadcast %18 : vector<1x4x128xf32> to vector<2x4x128xf32>
    %24 = arith.mulf %22, %23 : vector<2x4x128xf32>
    %25 = arith.subf %21, %24 : vector<2x4x128xf32>
    %26 = arith.addf %0, %25 : vector<2x4x128xf32>
    %27 = vector.broadcast %9 : vector<2x1x128xf32> to vector<2x4x128xf32>
    %28 = vector.broadcast %18 : vector<1x4x128xf32> to vector<2x4x128xf32>
    %29 = arith.mulf %27, %28 : vector<2x4x128xf32>
    %30 = vector.broadcast %12 : vector<2x1x128xf32> to vector<2x4x128xf32>
    %31 = vector.broadcast %15 : vector<1x4x128xf32> to vector<2x4x128xf32>
    %32 = arith.mulf %30, %31 : vector<2x4x128xf32>
    %33 = arith.addf %29, %32 : vector<2x4x128xf32>
    %34 = arith.addf %0, %33 : vector<2x4x128xf32>
    %c1_i32 = arith.constant 1 : i32
    %35 = arith.index_cast %c1_i32 : i32 to index
    %c0_5 = arith.constant 0 : index
    %c0_6 = arith.constant 0 : index
    %c0_7 = arith.constant 0 : index
    %36 = vector.load %arg3[%35, %c0_5, %c0_6, %c0_7] : memref<4x2x2x128xf32, #tpu.memory_space<vmem>>, vector<1x2x2x128xf32>
    %37 = vector.shape_cast %36 : vector<1x2x2x128xf32> to vector<2x2x128xf32>
    %38 = arith.index_cast %c1_i32 : i32 to index
    %c0_8 = arith.constant 0 : index
    %c0_9 = arith.constant 0 : index
    %c0_10 = arith.constant 0 : index
    %39 = vector.load %arg4[%38, %c0_8, %c0_9, %c0_10] : memref<4x2x4x128xf32, #tpu.memory_space<vmem>>, vector<1x2x4x128xf32>
    %40 = vector.shape_cast %39 : vector<1x2x4x128xf32> to vector<2x4x128xf32>
    %41 = vector.extract_strided_slice %37 {offsets = [0, 0, 0], sizes = [1, 2, 128], strides = [1, 1, 1]} : vector<2x2x128xf32> to vector<1x2x128xf32>
    %42 = vector.shape_cast %41 : vector<1x2x128xf32> to vector<2x128xf32>
    %43 = vector.shape_cast %42 : vector<2x128xf32> to vector<2x1x128xf32>
    %44 = vector.extract_strided_slice %37 {offsets = [1, 0, 0], sizes = [1, 2, 128], strides = [1, 1, 1]} : vector<2x2x128xf32> to vector<1x2x128xf32>
    %45 = vector.shape_cast %44 : vector<1x2x128xf32> to vector<2x128xf32>
    %46 = vector.shape_cast %45 : vector<2x128xf32> to vector<2x1x128xf32>
    %47 = vector.extract_strided_slice %40 {offsets = [0, 0, 0], sizes = [1, 4, 128], strides = [1, 1, 1]} : vector<2x4x128xf32> to vector<1x4x128xf32>
    %48 = vector.shape_cast %47 : vector<1x4x128xf32> to vector<4x128xf32>
    %49 = vector.shape_cast %48 : vector<4x128xf32> to vector<1x4x128xf32>
    %50 = vector.extract_strided_slice %40 {offsets = [1, 0, 0], sizes = [1, 4, 128], strides = [1, 1, 1]} : vector<2x4x128xf32> to vector<1x4x128xf32>
    %51 = vector.shape_cast %50 : vector<1x4x128xf32> to vector<4x128xf32>
    %52 = vector.shape_cast %51 : vector<4x128xf32> to vector<1x4x128xf32>
    %53 = vector.broadcast %43 : vector<2x1x128xf32> to vector<2x4x128xf32>
    %54 = vector.broadcast %49 : vector<1x4x128xf32> to vector<2x4x128xf32>
    %55 = arith.mulf %53, %54 : vector<2x4x128xf32>
    %56 = vector.broadcast %46 : vector<2x1x128xf32> to vector<2x4x128xf32>
    %57 = vector.broadcast %52 : vector<1x4x128xf32> to vector<2x4x128xf32>
    %58 = arith.mulf %56, %57 : vector<2x4x128xf32>
    %59 = arith.subf %55, %58 : vector<2x4x128xf32>
    %60 = arith.addf %26, %59 : vector<2x4x128xf32>
    %61 = vector.broadcast %43 : vector<2x1x128xf32> to vector<2x4x128xf32>
    %62 = vector.broadcast %52 : vector<1x4x128xf32> to vector<2x4x128xf32>
    %63 = arith.mulf %61, %62 : vector<2x4x128xf32>
    %64 = vector.broadcast %46 : vector<2x1x128xf32> to vector<2x4x128xf32>
    %65 = vector.broadcast %49 : vector<1x4x128xf32> to vector<2x4x128xf32>
    %66 = arith.mulf %64, %65 : vector<2x4x128xf32>
    %67 = arith.addf %63, %66 : vector<2x4x128xf32>
    %68 = arith.addf %34, %67 : vector<2x4x128xf32>
    %c2_i32 = arith.constant 2 : i32
    %69 = arith.index_cast %c2_i32 : i32 to index
    %c0_11 = arith.constant 0 : index
    %c0_12 = arith.constant 0 : index
    %c0_13 = arith.constant 0 : index
    %70 = vector.load %arg3[%69, %c0_11, %c0_12, %c0_13] : memref<4x2x2x128xf32, #tpu.memory_space<vmem>>, vector<1x2x2x128xf32>
    %71 = vector.shape_cast %70 : vector<1x2x2x128xf32> to vector<2x2x128xf32>
    %72 = arith.index_cast %c2_i32 : i32 to index
    %c0_14 = arith.constant 0 : index
    %c0_15 = arith.constant 0 : index
    %c0_16 = arith.constant 0 : index
    %73 = vector.load %arg4[%72, %c0_14, %c0_15, %c0_16] : memref<4x2x4x128xf32, #tpu.memory_space<vmem>>, vector<1x2x4x128xf32>
    %74 = vector.shape_cast %73 : vector<1x2x4x128xf32> to vector<2x4x128xf32>
    %75 = vector.extract_strided_slice %71 {offsets = [0, 0, 0], sizes = [1, 2, 128], strides = [1, 1, 1]} : vector<2x2x128xf32> to vector<1x2x128xf32>
    %76 = vector.shape_cast %75 : vector<1x2x128xf32> to vector<2x128xf32>
    %77 = vector.shape_cast %76 : vector<2x128xf32> to vector<2x1x128xf32>
    %78 = vector.extract_strided_slice %71 {offsets = [1, 0, 0], sizes = [1, 2, 128], strides = [1, 1, 1]} : vector<2x2x128xf32> to vector<1x2x128xf32>
    %79 = vector.shape_cast %78 : vector<1x2x128xf32> to vector<2x128xf32>
    %80 = vector.shape_cast %79 : vector<2x128xf32> to vector<2x1x128xf32>
    %81 = vector.extract_strided_slice %74 {offsets = [0, 0, 0], sizes = [1, 4, 128], strides = [1, 1, 1]} : vector<2x4x128xf32> to vector<1x4x128xf32>
    %82 = vector.shape_cast %81 : vector<1x4x128xf32> to vector<4x128xf32>
    %83 = vector.shape_cast %82 : vector<4x128xf32> to vector<1x4x128xf32>
    %84 = vector.extract_strided_slice %74 {offsets = [1, 0, 0], sizes = [1, 4, 128], strides = [1, 1, 1]} : vector<2x4x128xf32> to vector<1x4x128xf32>
    %85 = vector.shape_cast %84 : vector<1x4x128xf32> to vector<4x128xf32>
    %86 = vector.shape_cast %85 : vector<4x128xf32> to vector<1x4x128xf32>
    %87 = vector.broadcast %77 : vector<2x1x128xf32> to vector<2x4x128xf32>
    %88 = vector.broadcast %83 : vector<1x4x128xf32> to vector<2x4x128xf32>
    %89 = arith.mulf %87, %88 : vector<2x4x128xf32>
    %90 = vector.broadcast %80 : vector<2x1x128xf32> to vector<2x4x128xf32>
    %91 = vector.broadcast %86 : vector<1x4x128xf32> to vector<2x4x128xf32>
    %92 = arith.mulf %90, %91 : vector<2x4x128xf32>
    %93 = arith.subf %89, %92 : vector<2x4x128xf32>
    %94 = arith.addf %60, %93 : vector<2x4x128xf32>
    %95 = vector.broadcast %77 : vector<2x1x128xf32> to vector<2x4x128xf32>
    %96 = vector.broadcast %86 : vector<1x4x128xf32> to vector<2x4x128xf32>
    %97 = arith.mulf %95, %96 : vector<2x4x128xf32>
    %98 = vector.broadcast %80 : vector<2x1x128xf32> to vector<2x4x128xf32>
    %99 = vector.broadcast %83 : vector<1x4x128xf32> to vector<2x4x128xf32>
    %100 = arith.mulf %98, %99 : vector<2x4x128xf32>
    %101 = arith.addf %97, %100 : vector<2x4x128xf32>
    %102 = arith.addf %68, %101 : vector<2x4x128xf32>
    %c3_i32 = arith.constant 3 : i32
    %103 = arith.index_cast %c3_i32 : i32 to index
    %c0_17 = arith.constant 0 : index
    %c0_18 = arith.constant 0 : index
    %c0_19 = arith.constant 0 : index
    %104 = vector.load %arg3[%103, %c0_17, %c0_18, %c0_19] : memref<4x2x2x128xf32, #tpu.memory_space<vmem>>, vector<1x2x2x128xf32>
    %105 = vector.shape_cast %104 : vector<1x2x2x128xf32> to vector<2x2x128xf32>
    %106 = arith.index_cast %c3_i32 : i32 to index
    %c0_20 = arith.constant 0 : index
    %c0_21 = arith.constant 0 : index
    %c0_22 = arith.constant 0 : index
    %107 = vector.load %arg4[%106, %c0_20, %c0_21, %c0_22] : memref<4x2x4x128xf32, #tpu.memory_space<vmem>>, vector<1x2x4x128xf32>
    %108 = vector.shape_cast %107 : vector<1x2x4x128xf32> to vector<2x4x128xf32>
    %109 = vector.extract_strided_slice %105 {offsets = [0, 0, 0], sizes = [1, 2, 128], strides = [1, 1, 1]} : vector<2x2x128xf32> to vector<1x2x128xf32>
    %110 = vector.shape_cast %109 : vector<1x2x128xf32> to vector<2x128xf32>
    %111 = vector.shape_cast %110 : vector<2x128xf32> to vector<2x1x128xf32>
    %112 = vector.extract_strided_slice %105 {offsets = [1, 0, 0], sizes = [1, 2, 128], strides = [1, 1, 1]} : vector<2x2x128xf32> to vector<1x2x128xf32>
    %113 = vector.shape_cast %112 : vector<1x2x128xf32> to vector<2x128xf32>
    %114 = vector.shape_cast %113 : vector<2x128xf32> to vector<2x1x128xf32>
    %115 = vector.extract_strided_slice %108 {offsets = [0, 0, 0], sizes = [1, 4, 128], strides = [1, 1, 1]} : vector<2x4x128xf32> to vector<1x4x128xf32>
    %116 = vector.shape_cast %115 : vector<1x4x128xf32> to vector<4x128xf32>
    %117 = vector.shape_cast %116 : vector<4x128xf32> to vector<1x4x128xf32>
    %118 = vector.extract_strided_slice %108 {offsets = [1, 0, 0], sizes = [1, 4, 128], strides = [1, 1, 1]} : vector<2x4x128xf32> to vector<1x4x128xf32>
    %119 = vector.shape_cast %118 : vector<1x4x128xf32> to vector<4x128xf32>
    %120 = vector.shape_cast %119 : vector<4x128xf32> to vector<1x4x128xf32>
    %121 = vector.broadcast %111 : vector<2x1x128xf32> to vector<2x4x128xf32>
    %122 = vector.broadcast %117 : vector<1x4x128xf32> to vector<2x4x128xf32>
    %123 = arith.mulf %121, %122 : vector<2x4x128xf32>
    %124 = vector.broadcast %114 : vector<2x1x128xf32> to vector<2x4x128xf32>
    %125 = vector.broadcast %120 : vector<1x4x128xf32> to vector<2x4x128xf32>
    %126 = arith.mulf %124, %125 : vector<2x4x128xf32>
    %127 = arith.subf %123, %126 : vector<2x4x128xf32>
    %128 = arith.addf %94, %127 : vector<2x4x128xf32>
    %129 = vector.broadcast %111 : vector<2x1x128xf32> to vector<2x4x128xf32>
    %130 = vector.broadcast %120 : vector<1x4x128xf32> to vector<2x4x128xf32>
    %131 = arith.mulf %129, %130 : vector<2x4x128xf32>
    %132 = vector.broadcast %114 : vector<2x1x128xf32> to vector<2x4x128xf32>
    %133 = vector.broadcast %117 : vector<1x4x128xf32> to vector<2x4x128xf32>
    %134 = arith.mulf %132, %133 : vector<2x4x128xf32>
    %135 = arith.addf %131, %134 : vector<2x4x128xf32>
    %136 = arith.addf %102, %135 : vector<2x4x128xf32>
    %c4_i32 = arith.constant 4 : i32
    %c0_23 = arith.constant 0 : index
    %c0_24 = arith.constant 0 : index
    %c0_25 = arith.constant 0 : index
    %c0_26 = arith.constant 0 : index
    %137 = vector.load %arg5[%c0_23, %c0_24, %c0_25, %c0_26] : memref<2x2x4x128xf32, #tpu.memory_space<vmem>>, vector<1x2x4x128xf32>
    %138 = vector.shape_cast %137 : vector<1x2x4x128xf32> to vector<2x4x128xf32>
    %139 = vector.shape_cast %128 : vector<2x4x128xf32> to vector<1x2x4x128xf32>
    tpu.vector_store %arg5[%c0_23, %c0_24, %c0_25, %c0_26], %139 {strides = array<i32>} : memref<2x2x4x128xf32, #tpu.memory_space<vmem>>, vector<1x2x4x128xf32>,
    %c1 = arith.constant 1 : index
    %c0_27 = arith.constant 0 : index
    %c0_28 = arith.constant 0 : index
    %c0_29 = arith.constant 0 : index
    %140 = vector.load %arg5[%c1, %c0_27, %c0_28, %c0_29] : memref<2x2x4x128xf32, #tpu.memory_space<vmem>>, vector<1x2x4x128xf32>
    %141 = vector.shape_cast %140 : vector<1x2x4x128xf32> to vector<2x4x128xf32>
    %142 = vector.shape_cast %136 : vector<2x4x128xf32> to vector<1x2x4x128xf32>
    tpu.vector_store %arg5[%c1, %c0_27, %c0_28, %c0_29], %142 {strides = array<i32>} : memref<2x2x4x128xf32, #tpu.memory_space<vmem>>, vector<1x2x4x128xf32>,
    return
  }
  func.func @transform_0(%arg0: i32, %arg1: i32, %arg2: i32) -> (i32, i32, i32, i32) {
    %c0_i32 = arith.constant 0 : i32
    %c0_i32_0 = arith.constant 0 : i32
    %c0_i32_1 = arith.constant 0 : i32
    return %c0_i32, %c0_i32_0, %arg0, %arg2 : i32, i32, i32, i32
  }
  func.func @transform_1(%arg0: i32, %arg1: i32, %arg2: i32) -> (i32, i32, i32, i32) {
    %c0_i32 = arith.constant 0 : i32
    %c0_i32_0 = arith.constant 0 : i32
    %c0_i32_1 = arith.constant 0 : i32
    return %c0_i32, %c0_i32_0, %arg1, %arg2 : i32, i32, i32, i32
  }
  func.func @transform_2(%arg0: i32, %arg1: i32, %arg2: i32) -> (i32, i32, i32, i32) {
    %c0_i32 = arith.constant 0 : i32
    %c0_i32_0 = arith.constant 0 : i32
    return %c0_i32, %arg0, %arg1, %arg2 : i32, i32, i32, i32
  }
}

</mosaic_0001>

<llo_original>
// kernel: custom-call
$region0: #{custom-call}
  %s0 = inlined_call_operand.hbm [shape: c64[4,4,4,4], index: 0, kind: input, shape index: {}]
  %s1 = inlined_call_operand.vmem [shape: f32[4,4,4,4], index: 1, kind: output, shape index: {}]
  $region1: #{custom-call} parent=0
    #allocation0 [shape = 's32[1]{0}', space=sflag, size = 0x4, scoped, tag = 'scoped memory for custom-call']
    %2 = vsyncpa [#allocation0], 0
    %s4 = sshll.u32 %s0, 4
    %s5 = int_to_ptr.hbm [resolvable:$true] %s4
    %s6 = sshll.u32 %s1, 4
    %s7 = int_to_ptr.vmem [resolvable:$true] %s6
    %9 = dma.hbm_to_vmem [thread:$0]  %s5, 1024, %s7, [#allocation0]
    %11 = dma.done [#allocation0], 1024
    %12 = vsyncpa [#allocation0], 1

// kernel: custom-call.1
$region0: #{custom-call.1}
  %s0 = inlined_call_operand.hbm [shape: c64[4,4,4,4], index: 0, kind: input, shape index: {}]
  %s1 = inlined_call_operand.vmem [shape: f32[4,4,4,4], index: 1, kind: output, shape index: {}]
  %s2 = scalar_lea.hbm %s0, 64
  $region1: #{custom-call.1} parent=0
    #allocation0 [shape = 's32[1]{0}', space=sflag, size = 0x4, scoped, tag = 'scoped memory for custom-call.1']
    %3 = vsyncpa [#allocation0], 0
    %s5 = sshll.u32 %s2, 4
    %s6 = int_to_ptr.hbm [resolvable:$true] %s5
    %s7 = sshll.u32 %s1, 4
    %s8 = int_to_ptr.vmem [resolvable:$true] %s7
    %10 = dma.hbm_to_vmem [thread:$0]  %s6, 1024, %s8, [#allocation0]
    %12 = dma.done [#allocation0], 1024
    %13 = vsyncpa [#allocation0], 1

// kernel: fourier_layer_2d.1
$region0: #{fourier_layer_2d.1}
  #allocation0 [shape = 'u32[]', space=smem, size = 0x4, offset = 0x4, fixed_abs, tag = 'smem constant byte address 0x4 - core index']
  #allocation1 [shape = 'u32[72,128]{1,0:T(1,128)}', space=vmem, size = 0x9000, scoped, tag = 'internal scratch']
  %s0 = inlined_call_operand.vmem [shape: f32[4,2,2,128], index: 0, kind: input, shape index: {}]
  %s1 = inlined_call_operand.vmem [shape: f32[4,2,4,128], index: 1, kind: input, shape index: {}]
  %s2 = inlined_call_operand.vmem [shape: f32[2,2,4,128], index: 2, kind: output, shape index: {}]
  %s3 = sld [smem:[#allocation0]]
  $region18: #{fourier_layer_2d.1} parent=0
    _
  %s5 = ssub.s32 1, %s3
  %s6 = scalar_select 0, %s5, %s3
  // Predicated region
  $region2: #{fourier_layer_2d.1} parent=0 // pred_check
    _
  $region3: #{fourier_layer_2d.1} parent=0 // pred_check_branch
    %8 = sbr.rel (0) target = $region5
  $region4: #{fourier_layer_2d.1} parent=0 // pred_region
    _
  $region5: #{fourier_layer_2d.1} parent=0 // pred_fallthru
    _
  // Predicated region
  $region6: #{fourier_layer_2d.1} parent=0 // pred_check
    _
  $region7: #{fourier_layer_2d.1} parent=0 // pred_check_branch
    %10 = sbr.rel (0) target = $region9
  $region8: #{fourier_layer_2d.1} parent=0 // pred_region
    _
  $region9: #{fourier_layer_2d.1} parent=0 // pred_fallthru
    _
  %v11 = vld [vmem:[%s0] sm:$0x3]
  %v12 = vld [vmem:[%s0 + $0x2] sm:$0x3]
  %v13 = vld [vmem:[%s1] sm:$0xf]
  %v14 = vld [vmem:[%s1 + $0x4] sm:$0xf]
  %v16 = vrot.slane %v11, 1
  %v18 = vrot.slane %v12, 1
  %v19 = vperm.slane %v11, 0
  %v20 = vperm.slane %v16, 0
  %v23 = vmul.f32 %v19, %v13
  %v24 = vmul.f32 %v20, %v13
  %v25 = vperm.slane %v12, 0
  %v26 = vperm.slane %v18, 0
  %v29 = vmul.f32 %v25, %v14
  %v30 = vmul.f32 %v26, %v14
  %v31 = vsub.f32 %v23, %v29
  %v32 = vsub.f32 %v24, %v30
  %v33 = vadd.f32 %v31, 0.0
  %v34 = vadd.f32 %v32, 0.0
  %v35 = vmul.f32 %v19, %v14
  %v36 = vmul.f32 %v20, %v14
  %v37 = vmul.f32 %v25, %v13
  %v38 = vmul.f32 %v26, %v13
  %v39 = vadd.f32 %v35, %v37
  %v40 = vadd.f32 %v36, %v38
  %v41 = vadd.f32 %v39, 0.0
  %v42 = vadd.f32 %v40, 0.0
  %s43 = scalar_lea.vmem %s0, 4
  %v44 = vld [vmem:[%s43] sm:$0x3]
  %v45 = vld [vmem:[%s43 + $0x2] sm:$0x3]
  %s46 = scalar_lea.vmem %s1, 8
  %v47 = vld [vmem:[%s46] sm:$0xf]
  %v48 = vld [vmem:[%s46 + $0x4] sm:$0xf]
  %v50 = vrot.slane %v44, 1
  %v52 = vrot.slane %v45, 1
  %v53 = vperm.slane %v44, 0
  %v54 = vperm.slane %v50, 0
  %v57 = vmul.f32 %v53, %v47
  %v58 = vmul.f32 %v54, %v47
  %v59 = vperm.slane %v45, 0
  %v60 = vperm.slane %v52, 0
  %v63 = vmul.f32 %v59, %v48
  %v64 = vmul.f32 %v60, %v48
  %v65 = vsub.f32 %v57, %v63
  %v66 = vsub.f32 %v58, %v64
  %v67 = vadd.f32 %v33, %v65
  %v68 = vadd.f32 %v34, %v66
  %v69 = vmul.f32 %v53, %v48
  %v70 = vmul.f32 %v54, %v48
  %v71 = vmul.f32 %v59, %v47
  %v72 = vmul.f32 %v60, %v47
  %v73 = vadd.f32 %v69, %v71
  %v74 = vadd.f32 %v70, %v72
  %v75 = vadd.f32 %v41, %v73
  %v76 = vadd.f32 %v42, %v74
  %s77 = scalar_lea.vmem %s0, 8
  %v78 = vld [vmem:[%s77] sm:$0x3]
  %v79 = vld [vmem:[%s77 + $0x2] sm:$0x3]
  %s80 = scalar_lea.vmem %s1, 16
  %v81 = vld [vmem:[%s80] sm:$0xf]
  %v82 = vld [vmem:[%s80 + $0x4] sm:$0xf]
  %v84 = vrot.slane %v78, 1
  %v86 = vrot.slane %v79, 1
  %v87 = vperm.slane %v78, 0
  %v88 = vperm.slane %v84, 0
  %v91 = vmul.f32 %v87, %v81
  %v92 = vmul.f32 %v88, %v81
  %v93 = vperm.slane %v79, 0
  %v94 = vperm.slane %v86, 0
  %v97 = vmul.f32 %v93, %v82
  %v98 = vmul.f32 %v94, %v82
  %v99 = vsub.f32 %v91, %v97
  %v100 = vsub.f32 %v92, %v98
  %v101 = vadd.f32 %v67, %v99
  %v102 = vadd.f32 %v68, %v100
  %v103 = vmul.f32 %v87, %v82
  %v104 = vmul.f32 %v88, %v82
  %v105 = vmul.f32 %v93, %v81
  %v106 = vmul.f32 %v94, %v81
  %v107 = vadd.f32 %v103, %v105
  %v108 = vadd.f32 %v104, %v106
  %v109 = vadd.f32 %v75, %v107
  %v110 = vadd.f32 %v76, %v108
  %s111 = scalar_lea.vmem %s0, 12
  %v112 = vld [vmem:[%s111] sm:$0x3]
  %v113 = vld [vmem:[%s111 + $0x2] sm:$0x3]
  %s114 = scalar_lea.vmem %s1, 24
  %v115 = vld [vmem:[%s114] sm:$0xf]
  %v116 = vld [vmem:[%s114 + $0x4] sm:$0xf]
  %v118 = vrot.slane %v112, 1
  %v120 = vrot.slane %v113, 1
  %v121 = vperm.slane %v112, 0
  %v122 = vperm.slane %v118, 0
  %v125 = vmul.f32 %v121, %v115
  %v126 = vmul.f32 %v122, %v115
  %v127 = vperm.slane %v113, 0
  %v128 = vperm.slane %v120, 0
  %v131 = vmul.f32 %v127, %v116
  %v132 = vmul.f32 %v128, %v116
  %v133 = vsub.f32 %v125, %v131
  %v134 = vsub.f32 %v126, %v132
  %v135 = vadd.f32 %v101, %v133
  %v136 = vadd.f32 %v102, %v134
  %v137 = vmul.f32 %v121, %v116
  %v138 = vmul.f32 %v122, %v116
  %v139 = vmul.f32 %v127, %v115
  %v140 = vmul.f32 %v128, %v115
  %v141 = vadd.f32 %v137, %v139
  %v142 = vadd.f32 %v138, %v140
  %v143 = vadd.f32 %v109, %v141
  %v144 = vadd.f32 %v110, %v142
  %145 = vst [vmem:[%s2] sm:$0xf] %v135
  %146 = vst [vmem:[%s2 + $0x4] sm:$0xf] %v136
  %s147 = scalar_lea.vmem %s2, 8
  %148 = vst [vmem:[%s147] sm:$0xf] %v143
  %149 = vst [vmem:[%s147 + $0x4] sm:$0xf] %v144
  // Predicated region
  $region10: #{fourier_layer_2d.1} parent=0 // pred_check
    _
  $region11: #{fourier_layer_2d.1} parent=0 // pred_check_branch
    %151 = sbr.rel (0) target = $region13
  $region12: #{fourier_layer_2d.1} parent=0 // pred_region
    _
  $region13: #{fourier_layer_2d.1} parent=0 // pred_fallthru
    _
  // Predicated region
  $region14: #{fourier_layer_2d.1} parent=0 // pred_check
    _
  $region15: #{fourier_layer_2d.1} parent=0 // pred_check_branch
    %153 = sbr.rel (0) target = $region17
  $region16: #{fourier_layer_2d.1} parent=0 // pred_region
    _
  $region17: #{fourier_layer_2d.1} parent=0 // pred_fallthru
    _

// kernel: reverse.0
$region0: #{reverse.0}
  %s0 = inlined_call_operand.vmem [shape: f32[2,4,16,7], index: 0, kind: input, shape index: {}]
  %s1 = inlined_call_operand.vmem [shape: f32[2,4,16,7], index: 1, kind: output, shape index: {}]
  $region1: #{reverse.0} parent=0
    #allocation0 [shape = 'u8[65536]{0}', space=vmem, size = 0x10000, scoped, tag = 'operand span for operand 0']
    #allocation1 [shape = 'u8[32768]{0}', space=vmem, size = 0x8000, scoped, tag = 'operand span for operand 1']
    %s2 = scalar_lea.vmem [#allocation0], 8
    // Predicated region
    $region2: #{reverse.0} parent=1 // pred_check
      _
    $region3: #{reverse.0} parent=1 // pred_check_branch
      %4 = sbr.rel (0) target = $region5
    $region4: #{reverse.0} parent=1 // pred_region
      // Predicated region
      $region6: #{reverse.0} parent=4 // pred_check
        _
      $region7: #{reverse.0} parent=4 // pred_check_branch
        %6 = sbr.rel (0) target = $region9
      $region8: #{reverse.0} parent=4 // pred_region
        // Predicated region
        $region21: #{reverse.0} parent=8 // pred_check
          _
        $region22: #{reverse.0} parent=8 // pred_check_branch
          %36 = sbr.rel (0) target = $region24
        $region23: #{reverse.0} parent=8 // pred_region
          loop: start=0, step=1, limit=1
          $region25: #{reverse.0} parent=23 // loop_pre_header
            _
          $region26: #{reverse.0} parent=23 // loop_header
            %s38 = sphi 0, %s42
            %p39 = scmp.ge.s32.totalorder %s38, 1
            %s43 = sphi %s0, %s0
            %s44 = sphi %s2, %s2
          $region27: #{reverse.0} parent=23 // loop_header_branch
            %41 = sbr.rel (%p39) target = $region31
          $region28: #{reverse.0} parent=23 // loop_body
            %v45 = vld [vmem:[%s43] sm:$0xff]
            %46 = vst [vmem:[%s44] sm:$0xff] %v45
            %v47 = vld [vmem:[%s43 + $0x8] sm:$0xff]
            %48 = vst [vmem:[%s44 + $0x10] sm:$0xff] %v47
            %v49 = vld [vmem:[%s43 + $0x10] sm:$0xff]
            %50 = vst [vmem:[%s44 + $0x20] sm:$0xff] %v49
            %v51 = vld [vmem:[%s43 + $0x18] sm:$0xff]
            %52 = vst [vmem:[%s44 + $0x30] sm:$0xff] %v51
            %v53 = vld [vmem:[%s43 + $0x20] sm:$0xff]
            %54 = vst [vmem:[%s44 + $0x40] sm:$0xff] %v53
            %v55 = vld [vmem:[%s43 + $0x28] sm:$0xff]
            %56 = vst [vmem:[%s44 + $0x50] sm:$0xff] %v55
            %v57 = vld [vmem:[%s43 + $0x30] sm:$0xff]
            %58 = vst [vmem:[%s44 + $0x60] sm:$0xff] %v57
            %v59 = vld [vmem:[%s43 + $0x38] sm:$0xff]
            %60 = vst [vmem:[%s44 + $0x70] sm:$0xff] %v59
          $region29: #{reverse.0} parent=23 // loop_footer
            %s42 = sadd.s32 1, %s38
          $region30: #{reverse.0} parent=23 // loop_footer_branch
            %37 = sbr.rel target = $region26
          $region31: #{reverse.0} parent=23 // loop_exit
            _
        $region24: #{reverse.0} parent=8 // pred_fallthru
          _
        // Predicated region
        $region32: #{reverse.0} parent=8 // pred_check
          _
        $region33: #{reverse.0} parent=8 // pred_check_branch
          %62 = sbr.rel target = $region35
        $region34: #{reverse.0} parent=8 // pred_region
          _
        $region35: #{reverse.0} parent=8 // pred_fallthru
          _
      $region9: #{reverse.0} parent=4 // pred_fallthru
        _
      // Predicated region
      $region10: #{reverse.0} parent=4 // pred_check
        _
      $region11: #{reverse.0} parent=4 // pred_check_branch
        %8 = sbr.rel target = $region13
      $region12: #{reverse.0} parent=4 // pred_region
        %s10 = ssub.s32 256, 1
        loop: start=0, step=1, limit=1
        $region14: #{reverse.0} parent=12 // loop_pre_header
          _
        $region15: #{reverse.0} parent=12 // loop_header
          %s12 = sphi 0, %s16
          %p13 = scmp.ge.s32.totalorder %s12, 1
          %s17 = sphi %s0, %s0
          %s18 = sphi %s2, %s2
        $region16: #{reverse.0} parent=12 // loop_header_branch
          %15 = sbr.rel (%p13) target = $region20
        $region17: #{reverse.0} parent=12 // loop_body
          %v19 = vld [vmem:[%s17] sm:%s10]
          %20 = vst [vmem:[%s18] sm:%s10] %v19
          %v21 = vld [vmem:[%s17 + $0x8] sm:%s10]
          %22 = vst [vmem:[%s18 + $0x10] sm:%s10] %v21
          %v23 = vld [vmem:[%s17 + $0x10] sm:%s10]
          %24 = vst [vmem:[%s18 + $0x20] sm:%s10] %v23
          %v25 = vld [vmem:[%s17 + $0x18] sm:%s10]
          %26 = vst [vmem:[%s18 + $0x30] sm:%s10] %v25
          %v27 = vld [vmem:[%s17 + $0x20] sm:%s10]
          %28 = vst [vmem:[%s18 + $0x40] sm:%s10] %v27
          %v29 = vld [vmem:[%s17 + $0x28] sm:%s10]
          %30 = vst [vmem:[%s18 + $0x50] sm:%s10] %v29
          %v31 = vld [vmem:[%s17 + $0x30] sm:%s10]
          %32 = vst [vmem:[%s18 + $0x60] sm:%s10] %v31
          %v33 = vld [vmem:[%s17 + $0x38] sm:%s10]
          %34 = vst [vmem:[%s18 + $0x70] sm:%s10] %v33
        $region18: #{reverse.0} parent=12 // loop_footer
          %s16 = sadd.s32 1, %s12
        $region19: #{reverse.0} parent=12 // loop_footer_branch
          %11 = sbr.rel target = $region15
        $region20: #{reverse.0} parent=12 // loop_exit
          _
      $region13: #{reverse.0} parent=4 // pred_fallthru
        _
    $region5: #{reverse.0} parent=1 // pred_fallthru
      _
    %63 = vnop
    %s64 = scalar_lea.vmem [#allocation0], 7
    %v65 = vld [vmem:[%s64] ss:$-1 sm:$0xff]
    %v66 = vrot.slane %v65, 1
    %67 = vst [vmem:[#allocation1] sm:$0xff] %v66
    %s68 = scalar_lea.vmem [#allocation0], 8
    %s69 = scalar_lea.vmem %s68, 7 [#allocation0]
    %v70 = vld [vmem:[%s69] ss:$-1 sm:$0xff]
    %v71 = vrot.slane %v70, 1
    %v72 = vlaneseq
    %v73 = vshrl.u32 %v72, 7
    %vm74 = vcmp.lt.s32.totalorder %v73, 7
    %75 = vst.msk [vmem:[#allocation1] sm:$0xff] %vm74, %v71
    %s76 = scalar_lea.vmem [#allocation1], 8
    %s77 = scalar_lea.vmem [#allocation0], 16
    %s78 = scalar_lea.vmem %s77, 7 [#allocation0]
    %v79 = vld [vmem:[%s78] ss:$-1 sm:$0xff]
    %v80 = vrot.slane %v79, 1
    %81 = vst [vmem:[%s76] sm:$0xff] %v80
    %s82 = scalar_lea.vmem %s77, 8 [#allocation0]
    %s83 = scalar_lea.vmem %s82, 7 [#allocation0]
    %v84 = vld [vmem:[%s83] ss:$-1 sm:$0xff]
    %v85 = vrot.slane %v84, 1
    %v86 = vlaneseq
    %v87 = vshrl.u32 %v86, 7
    %vm88 = vcmp.lt.s32.totalorder %v87, 7
    %89 = vst.msk [vmem:[%s76] sm:$0xff] %vm88, %v85
    %s90 = scalar_lea.vmem [#allocation1], 16
    %s91 = scalar_lea.vmem [#allocation0], 32
    %s92 = scalar_lea.vmem %s91, 7 [#allocation0]
    %v93 = vld [vmem:[%s92] ss:$-1 sm:$0xff]
    %v94 = vrot.slane %v93, 1
    %95 = vst [vmem:[%s90] sm:$0xff] %v94
    %s96 = scalar_lea.vmem %s91, 8 [#allocation0]
    %s97 = scalar_lea.vmem %s96, 7 [#allocation0]
    %v98 = vld [vmem:[%s97] ss:$-1 sm:$0xff]
    %v99 = vrot.slane %v98, 1
    %v100 = vlaneseq
    %v101 = vshrl.u32 %v100, 7
    %vm102 = vcmp.lt.s32.totalorder %v101, 7
    %103 = vst.msk [vmem:[%s90] sm:$0xff] %vm102, %v99
    %s104 = scalar_lea.vmem [#allocation1], 24
    %s105 = scalar_lea.vmem [#allocation0], 48
    %s106 = scalar_lea.vmem %s105, 7 [#allocation0]
    %v107 = vld [vmem:[%s106] ss:$-1 sm:$0xff]
    %v108 = vrot.slane %v107, 1
    %109 = vst [vmem:[%s104] sm:$0xff] %v108
    %s110 = scalar_lea.vmem %s105, 8 [#allocation0]
    %s111 = scalar_lea.vmem %s110, 7 [#allocation0]
    %v112 = vld [vmem:[%s111] ss:$-1 sm:$0xff]
    %v113 = vrot.slane %v112, 1
    %v114 = vlaneseq
    %v115 = vshrl.u32 %v114, 7
    %vm116 = vcmp.lt.s32.totalorder %v115, 7
    %117 = vst.msk [vmem:[%s104] sm:$0xff] %vm116, %v113
    %s118 = scalar_lea.vmem [#allocation1], 32
    %s119 = scalar_lea.vmem [#allocation0], 64
    %s120 = scalar_lea.vmem %s119, 7 [#allocation0]
    %v121 = vld [vmem:[%s120] ss:$-1 sm:$0xff]
    %v122 = vrot.slane %v121, 1
    %123 = vst [vmem:[%s118] sm:$0xff] %v122
    %s124 = scalar_lea.vmem %s119, 8 [#allocation0]
    %s125 = scalar_lea.vmem %s124, 7 [#allocation0]
    %v126 = vld [vmem:[%s125] ss:$-1 sm:$0xff]
    %v127 = vrot.slane %v126, 1
    %v128 = vlaneseq
    %v129 = vshrl.u32 %v128, 7
    %vm130 = vcmp.lt.s32.totalorder %v129, 7
    %131 = vst.msk [vmem:[%s118] sm:$0xff] %vm130, %v127
    %s132 = scalar_lea.vmem [#allocation1], 40
    %s133 = scalar_lea.vmem [#allocation0], 80
    %s134 = scalar_lea.vmem %s133, 7 [#allocation0]
    %v135 = vld [vmem:[%s134] ss:$-1 sm:$0xff]
    %v136 = vrot.slane %v135, 1
    %137 = vst [vmem:[%s132] sm:$0xff] %v136
    %s138 = scalar_lea.vmem %s133, 8 [#allocation0]
    %s139 = scalar_lea.vmem %s138, 7 [#allocation0]
    %v140 = vld [vmem:[%s139] ss:$-1 sm:$0xff]
    %v141 = vrot.slane %v140, 1
    %v142 = vlaneseq
    %v143 = vshrl.u32 %v142, 7
    %vm144 = vcmp.lt.s32.totalorder %v143, 7
    %145 = vst.msk [vmem:[%s132] sm:$0xff] %vm144, %v141
    %s146 = scalar_lea.vmem [#allocation1], 48
    %s147 = scalar_lea.vmem [#allocation0], 96
    %s148 = scalar_lea.vmem %s147, 7 [#allocation0]
    %v149 = vld [vmem:[%s148] ss:$-1 sm:$0xff]
    %v150 = vrot.slane %v149, 1
    %151 = vst [vmem:[%s146] sm:$0xff] %v150
    %s152 = scalar_lea.vmem %s147, 8 [#allocation0]
    %s153 = scalar_lea.vmem %s152, 7 [#allocation0]
    %v154 = vld [vmem:[%s153] ss:$-1 sm:$0xff]
    %v155 = vrot.slane %v154, 1
    %v156 = vlaneseq
    %v157 = vshrl.u32 %v156, 7
    %vm158 = vcmp.lt.s32.totalorder %v157, 7
    %159 = vst.msk [vmem:[%s146] sm:$0xff] %vm158, %v155
    %s160 = scalar_lea.vmem [#allocation1], 56
    %s161 = scalar_lea.vmem [#allocation0], 112
    %s162 = scalar_lea.vmem %s161, 7 [#allocation0]
    %v163 = vld [vmem:[%s162] ss:$-1 sm:$0xff]
    %v164 = vrot.slane %v163, 1
    %165 = vst [vmem:[%s160] sm:$0xff] %v164
    %s166 = scalar_lea.vmem %s161, 8 [#allocation0]
    %s167 = scalar_lea.vmem %s166, 7 [#allocation0]
    %v168 = vld [vmem:[%s167] ss:$-1 sm:$0xff]
    %v169 = vrot.slane %v168, 1
    %v170 = vlaneseq
    %v171 = vshrl.u32 %v170, 7
    %vm172 = vcmp.lt.s32.totalorder %v171, 7
    %173 = vst.msk [vmem:[%s160] sm:$0xff] %vm172, %v169
    // Predicated region
    $region36: #{reverse.0} parent=1 // pred_check
      _
    $region37: #{reverse.0} parent=1 // pred_check_branch
      %175 = sbr.rel (0) target = $region39
    $region38: #{reverse.0} parent=1 // pred_region
      // Predicated region
      $region40: #{reverse.0} parent=38 // pred_check
        _
      $region41: #{reverse.0} parent=38 // pred_check_branch
        %177 = sbr.rel (0) target = $region43
      $region42: #{reverse.0} parent=38 // pred_region
        // Predicated region
        $region55: #{reverse.0} parent=42 // pred_check
          _
        $region56: #{reverse.0} parent=42 // pred_check_branch
          %207 = sbr.rel (0) target = $region58
        $region57: #{reverse.0} parent=42 // pred_region
          loop: start=0, step=1, limit=1
          $region59: #{reverse.0} parent=57 // loop_pre_header
            _
          $region60: #{reverse.0} parent=57 // loop_header
            %s209 = sphi 0, %s213
            %p210 = scmp.ge.s32.totalorder %s209, 1
            %s214 = sphi [#allocation1], [#allocation1]
            %s215 = sphi %s1, %s1
          $region61: #{reverse.0} parent=57 // loop_header_branch
            %212 = sbr.rel (%p210) target = $region65
          $region62: #{reverse.0} parent=57 // loop_body
            %v216 = vld [vmem:[%s214] sm:$0xff]
            %217 = vst [vmem:[%s215] sm:$0xff] %v216
            %v218 = vld [vmem:[%s214 + $0x8] sm:$0xff]
            %219 = vst [vmem:[%s215 + $0x8] sm:$0xff] %v218
            %v220 = vld [vmem:[%s214 + $0x10] sm:$0xff]
            %221 = vst [vmem:[%s215 + $0x10] sm:$0xff] %v220
            %v222 = vld [vmem:[%s214 + $0x18] sm:$0xff]
            %223 = vst [vmem:[%s215 + $0x18] sm:$0xff] %v222
            %v224 = vld [vmem:[%s214 + $0x20] sm:$0xff]
            %225 = vst [vmem:[%s215 + $0x20] sm:$0xff] %v224
            %v226 = vld [vmem:[%s214 + $0x28] sm:$0xff]
            %227 = vst [vmem:[%s215 + $0x28] sm:$0xff] %v226
            %v228 = vld [vmem:[%s214 + $0x30] sm:$0xff]
            %229 = vst [vmem:[%s215 + $0x30] sm:$0xff] %v228
            %v230 = vld [vmem:[%s214 + $0x38] sm:$0xff]
            %231 = vst [vmem:[%s215 + $0x38] sm:$0xff] %v230
          $region63: #{reverse.0} parent=57 // loop_footer
            %s213 = sadd.s32 1, %s209
          $region64: #{reverse.0} parent=57 // loop_footer_branch
            %208 = sbr.rel target = $region60
          $region65: #{reverse.0} parent=57 // loop_exit
            _
        $region58: #{reverse.0} parent=42 // pred_fallthru
          _
        // Predicated region
        $region66: #{reverse.0} parent=42 // pred_check
          _
        $region67: #{reverse.0} parent=42 // pred_check_branch
          %233 = sbr.rel target = $region69
        $region68: #{reverse.0} parent=42 // pred_region
          _
        $region69: #{reverse.0} parent=42 // pred_fallthru
          _
      $region43: #{reverse.0} parent=38 // pred_fallthru
        _
      // Predicated region
      $region44: #{reverse.0} parent=38 // pred_check
        _
      $region45: #{reverse.0} parent=38 // pred_check_branch
        %179 = sbr.rel target = $region47
      $region46: #{reverse.0} parent=38 // pred_region
        %s181 = ssub.s32 256, 1
        loop: start=0, step=1, limit=1
        $region48: #{reverse.0} parent=46 // loop_pre_header
          _
        $region49: #{reverse.0} parent=46 // loop_header
          %s183 = sphi 0, %s187
          %p184 = scmp.ge.s32.totalorder %s183, 1
          %s188 = sphi [#allocation1], [#allocation1]
          %s189 = sphi %s1, %s1
        $region50: #{reverse.0} parent=46 // loop_header_branch
          %186 = sbr.rel (%p184) target = $region54
        $region51: #{reverse.0} parent=46 // loop_body
          %v190 = vld [vmem:[%s188] sm:%s181]
          %191 = vst [vmem:[%s189] sm:%s181] %v190
          %v192 = vld [vmem:[%s188 + $0x8] sm:%s181]
          %193 = vst [vmem:[%s189 + $0x8] sm:%s181] %v192
          %v194 = vld [vmem:[%s188 + $0x10] sm:%s181]
          %195 = vst [vmem:[%s189 + $0x10] sm:%s181] %v194
          %v196 = vld [vmem:[%s188 + $0x18] sm:%s181]
          %197 = vst [vmem:[%s189 + $0x18] sm:%s181] %v196
          %v198 = vld [vmem:[%s188 + $0x20] sm:%s181]
          %199 = vst [vmem:[%s189 + $0x20] sm:%s181] %v198
          %v200 = vld [vmem:[%s188 + $0x28] sm:%s181]
          %201 = vst [vmem:[%s189 + $0x28] sm:%s181] %v200
          %v202 = vld [vmem:[%s188 + $0x30] sm:%s181]
          %203 = vst [vmem:[%s189 + $0x30] sm:%s181] %v202
          %v204 = vld [vmem:[%s188 + $0x38] sm:%s181]
          %205 = vst [vmem:[%s189 + $0x38] sm:%s181] %v204
        $region52: #{reverse.0} parent=46 // loop_footer
          %s187 = sadd.s32 1, %s183
        $region53: #{reverse.0} parent=46 // loop_footer_branch
          %182 = sbr.rel target = $region49
        $region54: #{reverse.0} parent=46 // loop_exit
          _
      $region47: #{reverse.0} parent=38 // pred_fallthru
        _
    $region39: #{reverse.0} parent=1 // pred_fallthru
      _
    %234 = vnop

</llo_original>
